<compile_context>
chip_gen: v7x
topology: tpu7x:2x2x1
jax: 0.10.0
libtpu: 0.0.40
codegen_flags: <defaults>
</compile_context>

<pallas_src>
import functools
import math

import jax
import jax.numpy as jnp
from jax.experimental import pallas as pl
from jax.experimental.pallas import tpu as pltpu


def _round_up(v, m):
    return ((v + m - 1) // m) * m


# ----------------------------- kernel --------------------------------------

def _make_mlp_kernel(num_layers):
    """h = relu(h @ W_i + b_i) for i < num_layers - 1; out = h @ W_last + b_last."""

    def kernel(*refs):
        x_ref = refs[0]
        out_ref = refs[-1]
        wb_refs = refs[1:-1]

        h = x_ref[...]
        for i in range(num_layers):  # static unroll (layer count is small)
            w_ref = wb_refs[2 * i]
            b_ref = wb_refs[2 * i + 1]
            h = jnp.dot(h, w_ref[...], preferred_element_type=jnp.float32) + b_ref[...]
            if i < num_layers - 1:
                h = jnp.maximum(h, 0.0)  # ReLU
        out_ref[...] = h.astype(out_ref.dtype)

    return kernel


def _const_spec(shape):
    """Constant-index weight/bias block: VMEM-resident across all grid steps.

    Buffered(1) disables the default double-buffering (the block index never
    changes), halving the resident weight VMEM footprint.  Falls back to the
    default if this JAX version's BlockSpec lacks `pipeline_mode`.
    """
    try:
        return pl.BlockSpec(shape, lambda i: (0, 0), pipeline_mode=pl.Buffered(1))
    except Exception:  # pragma: no cover - older BlockSpec signature
        return pl.BlockSpec(shape, lambda i: (0, 0))


# ----------------------------- wrapper --------------------------------------

@functools.partial(jax.jit, static_argnames=("tile_b",))
def mlp_forward(x, weights, biases, *, tile_b=256):
    """x: (B, input_dim) f32;  weights[i]: (d_i, d_{i+1});  biases[i]: (1, d_{i+1}).

    Returns (B, output_dim) f32, matching PyTorch MLP.forward.
    """
    B, d_in = x.shape
    num_layers = len(weights)
    out_dim = weights[-1].shape[1]

    # --- lane-dense padding: every dim (input/hidden/output) -> multiple of 128 ---
    dims = [d_in] + [int(w.shape[1]) for w in weights]
    pdims = [_round_up(d, 128) for d in dims]

    ws, bs = [], []
    for i, (w, b) in enumerate(zip(weights, biases)):
        w = jnp.pad(w, ((0, pdims[i] - dims[i]), (0, pdims[i + 1] - dims[i + 1])))
        b = jnp.pad(b, ((0, 0), (0, pdims[i + 1] - dims[i + 1])))
        ws.append(w)
        bs.append(b)

    x_p = jnp.pad(x, ((0, 0), (0, pdims[0] - d_in)))

    # --- batch tiling: whole batch in one step when small, else tile_b rows ---
    b_aligned = _round_up(B, 8)
    eff_tile = min(_round_up(int(tile_b), 8), b_aligned)
    b_padded = _round_up(b_aligned, eff_tile)
    if b_padded != B:
        x_p = jnp.pad(x_p, ((0, b_padded - B), (0, 0)))
    grid = (b_padded // eff_tile,)

    # --- specs ---
    in_specs = [pl.BlockSpec((eff_tile, pdims[0]), lambda i: (i, 0))]
    args = [x_p]
    for w, b in zip(ws, bs):
        in_specs.append(_const_spec(w.shape))
        in_specs.append(_const_spec(b.shape))
        args.append(w)
        args.append(b)
    out_specs = pl.BlockSpec((eff_tile, pdims[-1]), lambda i: (i, 0))

    # --- VMEM budget: resident weights (single-buffered) + 2x activation tiles ---
    f32_bytes = 4
    weight_bytes = sum(int(w.size) for w in ws) * f32_bytes \
                 + sum(int(b.size) for b in bs) * f32_bytes
    io_tile_bytes = 2 * eff_tile * (pdims[0] + pdims[-1]) * f32_bytes   # dbl-buffered x/out
    inter_bytes = 2 * eff_tile * max(pdims) * f32_bytes                 # intermediate h
    footprint = weight_bytes + io_tile_bytes + inter_bytes + (8 << 20)  # slack
    vmem_limit = int(min(max(footprint, 32 << 20), 100 << 20))
    # TODO(synk): if padded f32 weights exceed ~48 MiB (v7x has 64 MiB VMEM/TC),
    # switch to bf16 weights or stream weight tiles instead of keeping all resident.

    flops = 2 * b_padded * sum(pdims[i] * pdims[i + 1] for i in range(num_layers))
    bytes_accessed = (x_p.size + sum(int(w.size) for w in ws)
                      + sum(int(b.size) for b in bs)
                      + b_padded * pdims[-1]) * f32_bytes

    out = pl.pallas_call(
        _make_mlp_kernel(num_layers),
        out_shape=jax.ShapeDtypeStruct((b_padded, pdims[-1]), jnp.float32),
        grid=grid,
        in_specs=in_specs,
        out_specs=out_specs,
        compiler_params=pltpu.CompilerParams(
            dimension_semantics=("parallel",),   # batch tiles are independent
            vmem_limit_bytes=vmem_limit,
        ),
        cost_estimate=pl.CostEstimate(
            flops=flops, transcendentals=0, bytes_accessed=bytes_accessed),
    )(*args)

    return out[:B, :out_dim]


# ----------------------------- params ---------------------------------------

def init_params(key, input_dim, hidden_dim_list, output_dim):
    """Deterministic init mimicking nn.Linear's uniform(-1/sqrt(fan_in), +)."""
    dims = [input_dim] + list(hidden_dim_list) + [output_dim]
    weights, biases = [], []
    keys = jax.random.split(key, 2 * (len(dims) - 1))
    for i in range(len(dims) - 1):
        fan_in, fan_out = dims[i], dims[i + 1]
        bound = 1.0 / math.sqrt(fan_in)
        w = jax.random.uniform(keys[2 * i], (fan_in, fan_out),
                               minval=-bound, maxval=bound, dtype=jnp.float32)
        b = jax.random.uniform(keys[2 * i + 1], (1, fan_out),
                               minval=-bound, maxval=bound, dtype=jnp.float32)
        weights.append(w)
        biases.append(b)
    return tuple(weights), tuple(biases)


# ----------------------------- reference ------------------------------------

def reference_forward(x, weights, biases):
    h = x
    n = len(weights)
    for i in range(n):
        h = h @ weights[i] + biases[i]
        if i < n - 1:
            h = jnp.maximum(h, 0.0)
    return h


# ----------------------------- main ------------------------------------------

if __name__ == "__main__":
    input_dim = 32
    hidden_dim_list = [64, 32]
    output_dim = 8
    batch = 16

    key = jax.random.PRNGKey(0)
    kx, kp = jax.random.split(key)
    x = jax.random.normal(kx, (batch, input_dim), dtype=jnp.float32)
    weights, biases = init_params(kp, input_dim, hidden_dim_list, output_dim)

    out = mlp_forward(x, weights, biases)          # batch=16 -> grid=(1,), one step
    out = jax.block_until_ready(out)
    assert out.shape == (batch, output_dim), out.shape

    ref = jax.block_until_ready(reference_forward(x, weights, biases))
    if not jnp.allclose(out, ref, rtol=1e-4, atol=1e-4):
        raise AssertionError("Pallas kernel output mismatch vs JAX reference")

    print("KERNEL_OK")
</pallas_src>

<mosaic_0001>
module attributes {stable_mosaic.version = 11 : i64} {
  func.func @kernel(%arg0: i32, %arg1: memref<16x128xf32, #tpu.memory_space<vmem>>, %arg2: memref<128x128xf32, #tpu.memory_space<vmem>>, %arg3: memref<1x128xf32, #tpu.memory_space<vmem>>, %arg4: memref<128x128xf32, #tpu.memory_space<vmem>>, %arg5: memref<1x128xf32, #tpu.memory_space<vmem>>, %arg6: memref<128x128xf32, #tpu.memory_space<vmem>>, %arg7: memref<1x128xf32, #tpu.memory_space<vmem>>, %arg8: memref<16x128xf32, #tpu.memory_space<vmem>>) attributes {dimension_semantics = [#tpu.dimension_semantics<parallel>], iteration_bounds = array<i64: 1>, scalar_prefetch = 0 : i64, scratch_operands = 0 : i64, tpu.core_type = #tpu.core_type<tc>, window_params = [{transform_indices = @transform_0, window_bounds = array<i64: 16, 128>}, {pipeline_mode = #tpu.pipeline_mode<synchronous>, transform_indices = @transform_1, window_bounds = array<i64: 128, 128>}, {pipeline_mode = #tpu.pipeline_mode<synchronous>, transform_indices = @transform_2, window_bounds = array<i64: 1, 128>}, {pipeline_mode = #tpu.pipeline_mode<synchronous>, transform_indices = @transform_3, window_bounds = array<i64: 128, 128>}, {pipeline_mode = #tpu.pipeline_mode<synchronous>, transform_indices = @transform_4, window_bounds = array<i64: 1, 128>}, {pipeline_mode = #tpu.pipeline_mode<synchronous>, transform_indices = @transform_5, window_bounds = array<i64: 128, 128>}, {pipeline_mode = #tpu.pipeline_mode<synchronous>, transform_indices = @transform_6, window_bounds = array<i64: 1, 128>}, {transform_indices = @transform_7, window_bounds = array<i64: 16, 128>}]} {
    %c0 = arith.constant 0 : index
    %c0_0 = arith.constant 0 : index
    %0 = vector.load %arg1[%c0, %c0_0] : memref<16x128xf32, #tpu.memory_space<vmem>>, vector<16x128xf32>
    %c0_1 = arith.constant 0 : index
    %c0_2 = arith.constant 0 : index
    %1 = vector.load %arg2[%c0_1, %c0_2] : memref<128x128xf32, #tpu.memory_space<vmem>>, vector<128x128xf32>
    %cst = arith.constant dense<0.000000e+00> : vector<16x128xf32>
    %2 = tpu.matmul %0, %1, %cst {dimension_numbers = #tpu.dot_dimension_numbers<[1], [0], [0], [1], [0, 0, 1, 1], [], []>} : vector<16x128xf32>, vector<128x128xf32>, vector<16x128xf32> -> vector<16x128xf32>
    %c0_3 = arith.constant 0 : index
    %c0_4 = arith.constant 0 : index
    %3 = vector.load %arg3[%c0_3, %c0_4] : memref<1x128xf32, #tpu.memory_space<vmem>>, vector<1x128xf32>
    %4 = vector.broadcast %3 : vector<1x128xf32> to vector<16x128xf32>
    %5 = arith.addf %2, %4 : vector<16x128xf32>
    %cst_5 = arith.constant 0.000000e+00 : f32
    %6 = vector.broadcast %cst_5 : f32 to vector<16x128xf32>
    %7 = arith.maximumf %5, %6 : vector<16x128xf32>
    %c0_6 = arith.constant 0 : index
    %c0_7 = arith.constant 0 : index
    %8 = vector.load %arg4[%c0_6, %c0_7] : memref<128x128xf32, #tpu.memory_space<vmem>>, vector<128x128xf32>
    %cst_8 = arith.constant dense<0.000000e+00> : vector<16x128xf32>
    %9 = tpu.matmul %7, %8, %cst_8 {dimension_numbers = #tpu.dot_dimension_numbers<[1], [0], [0], [1], [0, 0, 1, 1], [], []>} : vector<16x128xf32>, vector<128x128xf32>, vector<16x128xf32> -> vector<16x128xf32>
    %c0_9 = arith.constant 0 : index
    %c0_10 = arith.constant 0 : index
    %10 = vector.load %arg5[%c0_9, %c0_10] : memref<1x128xf32, #tpu.memory_space<vmem>>, vector<1x128xf32>
    %11 = vector.broadcast %10 : vector<1x128xf32> to vector<16x128xf32>
    %12 = arith.addf %9, %11 : vector<16x128xf32>
    %cst_11 = arith.constant 0.000000e+00 : f32
    %13 = vector.broadcast %cst_11 : f32 to vector<16x128xf32>
    %14 = arith.maximumf %12, %13 : vector<16x128xf32>
    %c0_12 = arith.constant 0 : index
    %c0_13 = arith.constant 0 : index
    %15 = vector.load %arg6[%c0_12, %c0_13] : memref<128x128xf32, #tpu.memory_space<vmem>>, vector<128x128xf32>
    %cst_14 = arith.constant dense<0.000000e+00> : vector<16x128xf32>
    %16 = tpu.matmul %14, %15, %cst_14 {dimension_numbers = #tpu.dot_dimension_numbers<[1], [0], [0], [1], [0, 0, 1, 1], [], []>} : vector<16x128xf32>, vector<128x128xf32>, vector<16x128xf32> -> vector<16x128xf32>
    %c0_15 = arith.constant 0 : index
    %c0_16 = arith.constant 0 : index
    %17 = vector.load %arg7[%c0_15, %c0_16] : memref<1x128xf32, #tpu.memory_space<vmem>>, vector<1x128xf32>
    %18 = vector.broadcast %17 : vector<1x128xf32> to vector<16x128xf32>
    %19 = arith.addf %16, %18 : vector<16x128xf32>
    %c0_17 = arith.constant 0 : index
    %c0_18 = arith.constant 0 : index
    %20 = vector.load %arg8[%c0_17, %c0_18] : memref<16x128xf32, #tpu.memory_space<vmem>>, vector<16x128xf32>
    tpu.vector_store %arg8[%c0_17, %c0_18], %19 {strides = array<i32>} : memref<16x128xf32, #tpu.memory_space<vmem>>, vector<16x128xf32>,
    return
  }
  func.func @transform_0(%arg0: i32) -> (i32, i32) {
    %c0_i32 = arith.constant 0 : i32
    %c0_i32_0 = arith.constant 0 : i32
    return %arg0, %c0_i32 : i32, i32
  }
  func.func @transform_1(%arg0: i32) -> (i32, i32) {
    %c0_i32 = arith.constant 0 : i32
    %c0_i32_0 = arith.constant 0 : i32
    %c0_i32_1 = arith.constant 0 : i32
    return %c0_i32, %c0_i32_0 : i32, i32
  }
  func.func @transform_2(%arg0: i32) -> (i32, i32) {
    %c0_i32 = arith.constant 0 : i32
    %c0_i32_0 = arith.constant 0 : i32
    %c0_i32_1 = arith.constant 0 : i32
    return %c0_i32, %c0_i32_0 : i32, i32
  }
  func.func @transform_3(%arg0: i32) -> (i32, i32) {
    %c0_i32 = arith.constant 0 : i32
    %c0_i32_0 = arith.constant 0 : i32
    %c0_i32_1 = arith.constant 0 : i32
    return %c0_i32, %c0_i32_0 : i32, i32
  }
  func.func @transform_4(%arg0: i32) -> (i32, i32) {
    %c0_i32 = arith.constant 0 : i32
    %c0_i32_0 = arith.constant 0 : i32
    %c0_i32_1 = arith.constant 0 : i32
    return %c0_i32, %c0_i32_0 : i32, i32
  }
  func.func @transform_5(%arg0: i32) -> (i32, i32) {
    %c0_i32 = arith.constant 0 : i32
    %c0_i32_0 = arith.constant 0 : i32
    %c0_i32_1 = arith.constant 0 : i32
    return %c0_i32, %c0_i32_0 : i32, i32
  }
  func.func @transform_6(%arg0: i32) -> (i32, i32) {
    %c0_i32 = arith.constant 0 : i32
    %c0_i32_0 = arith.constant 0 : i32
    %c0_i32_1 = arith.constant 0 : i32
    return %c0_i32, %c0_i32_0 : i32, i32
  }
  func.func @transform_7(%arg0: i32) -> (i32, i32) {
    %c0_i32 = arith.constant 0 : i32
    %c0_i32_0 = arith.constant 0 : i32
    return %arg0, %c0_i32 : i32, i32
  }
}

</mosaic_0001>

<llo_original>
// kernel: mlp_forward.1
$region0: #{mlp_forward.1}
  #allocation0 [shape = 'u32[]', space=smem, size = 0x4, offset = 0x4, fixed_abs, tag = 'smem constant byte address 0x4 - core index']
  #allocation1 [shape = 'u32[144,128]{1,0:T(1,128)}', space=vmem, size = 0x12000, scoped, tag = 'internal scratch']
  %s0 = inlined_call_operand.vmem [shape: f32[16,128], index: 0, kind: input, shape index: {}]
  %s1 = inlined_call_operand.vmem [shape: f32[128,128], index: 1, kind: input, shape index: {}]
  %s2 = inlined_call_operand.vmem [shape: f32[1,128], index: 2, kind: input, shape index: {}]
  %s3 = inlined_call_operand.vmem [shape: f32[128,128], index: 3, kind: input, shape index: {}]
  %s4 = inlined_call_operand.vmem [shape: f32[1,128], index: 4, kind: input, shape index: {}]
  %s5 = inlined_call_operand.vmem [shape: f32[128,128], index: 5, kind: input, shape index: {}]
  %s6 = inlined_call_operand.vmem [shape: f32[1,128], index: 6, kind: input, shape index: {}]
  %s7 = inlined_call_operand.vmem [shape: f32[16,128], index: 7, kind: output, shape index: {}]
  %s8 = sld [smem:[#allocation0]]
  $region38: #{mlp_forward.1} parent=0
    _
  %s10 = ssub.s32 1, %s8
  %s11 = scalar_select 0, %s10, %s8
  // Predicated region
  $region2: #{mlp_forward.1} parent=0 // pred_check
    _
  $region3: #{mlp_forward.1} parent=0 // pred_check_branch
    %13 = sbr.rel (0) target = $region5
  $region4: #{mlp_forward.1} parent=0 // pred_region
    _
  $region5: #{mlp_forward.1} parent=0 // pred_fallthru
    _
  // Predicated region
  $region6: #{mlp_forward.1} parent=0 // pred_check
    _
  $region7: #{mlp_forward.1} parent=0 // pred_check_branch
    %15 = sbr.rel (0) target = $region9
  $region8: #{mlp_forward.1} parent=0 // pred_region
    _
  $region9: #{mlp_forward.1} parent=0 // pred_fallthru
    _
  // Predicated region
  $region10: #{mlp_forward.1} parent=0 // pred_check
    _
  $region11: #{mlp_forward.1} parent=0 // pred_check_branch
    %17 = sbr.rel (0) target = $region13
  $region12: #{mlp_forward.1} parent=0 // pred_region
    _
  $region13: #{mlp_forward.1} parent=0 // pred_fallthru
    _
  // Predicated region
  $region14: #{mlp_forward.1} parent=0 // pred_check
    _
  $region15: #{mlp_forward.1} parent=0 // pred_check_branch
    %19 = sbr.rel (0) target = $region17
  $region16: #{mlp_forward.1} parent=0 // pred_region
    _
  $region17: #{mlp_forward.1} parent=0 // pred_fallthru
    _
  // Predicated region
  $region18: #{mlp_forward.1} parent=0 // pred_check
    _
  $region19: #{mlp_forward.1} parent=0 // pred_check_branch
    %21 = sbr.rel (0) target = $region21
  $region20: #{mlp_forward.1} parent=0 // pred_region
    _
  $region21: #{mlp_forward.1} parent=0 // pred_fallthru
    _
  // Predicated region
  $region22: #{mlp_forward.1} parent=0 // pred_check
    _
  $region23: #{mlp_forward.1} parent=0 // pred_check_branch
    %23 = sbr.rel (0) target = $region25
  $region24: #{mlp_forward.1} parent=0 // pred_region
    _
  $region25: #{mlp_forward.1} parent=0 // pred_fallthru
    _
  // Predicated region
  $region26: #{mlp_forward.1} parent=0 // pred_check
    _
  $region27: #{mlp_forward.1} parent=0 // pred_check_branch
    %25 = sbr.rel (0) target = $region29
  $region28: #{mlp_forward.1} parent=0 // pred_region
    _
  $region29: #{mlp_forward.1} parent=0 // pred_fallthru
    _
  %v26 = vld [vmem:[%s0] sm:$0xff]
  %v27 = vld [vmem:[%s0 + $0x8] sm:$0xff]
  %v28 = vld [vmem:[%s1] sm:$0xff]
  %v29 = vld [vmem:[%s1 + $0x8] sm:$0xff]
  %v30 = vld [vmem:[%s1 + $0x10] sm:$0xff]
  %v31 = vld [vmem:[%s1 + $0x18] sm:$0xff]
  %v32 = vld [vmem:[%s1 + $0x20] sm:$0xff]
  %v33 = vld [vmem:[%s1 + $0x28] sm:$0xff]
  %v34 = vld [vmem:[%s1 + $0x30] sm:$0xff]
  %v35 = vld [vmem:[%s1 + $0x38] sm:$0xff]
  %v36 = vld [vmem:[%s1 + $0x40] sm:$0xff]
  %v37 = vld [vmem:[%s1 + $0x48] sm:$0xff]
  %v38 = vld [vmem:[%s1 + $0x50] sm:$0xff]
  %v39 = vld [vmem:[%s1 + $0x58] sm:$0xff]
  %v40 = vld [vmem:[%s1 + $0x60] sm:$0xff]
  %v41 = vld [vmem:[%s1 + $0x68] sm:$0xff]
  %v42 = vld [vmem:[%s1 + $0x70] sm:$0xff]
  %v43 = vld [vmem:[%s1 + $0x78] sm:$0xff]
  %v44 = vld [vmem:[%s2] sm:$0x1]
  %v46 = vlaneseq
  %v47 = vshrl.u32 %v46, 7
  %v48 = vsub.s32 0, %v47
  %v49 = vrot.slane %v44, %v48
  %51 = vmatprep.subr.mxu0 0.0
  %52 = vmatpush1.msra.mxu0 %v28
  %53 = vmatprep.subr.mxu0 0.0
  %54 = vmatpush1.msra.mxu0 %v29
  %55 = vmatprep.subr.mxu0 0.0
  %56 = vmatpush1.msra.mxu0 %v30
  %57 = vmatprep.subr.mxu0 0.0
  %58 = vmatpush1.msra.mxu0 %v31
  %59 = vmatprep.subr.mxu0 0.0
  %60 = vmatpush1.msra.mxu0 %v32
  %61 = vmatprep.subr.mxu0 0.0
  %62 = vmatpush1.msra.mxu0 %v33
  %63 = vmatprep.subr.mxu0 0.0
  %64 = vmatpush1.msra.mxu0 %v34
  %65 = vmatprep.subr.mxu0 0.0
  %66 = vmatpush1.msra.mxu0 %v35
  %67 = vmatprep.subr.mxu0 0.0
  %68 = vmatpush1.msra.mxu0 %v36
  %69 = vmatprep.subr.mxu0 0.0
  %70 = vmatpush1.msra.mxu0 %v37
  %71 = vmatprep.subr.mxu0 0.0
  %72 = vmatpush1.msra.mxu0 %v38
  %73 = vmatprep.subr.mxu0 0.0
  %74 = vmatpush1.msra.mxu0 %v39
  %75 = vmatprep.subr.mxu0 0.0
  %76 = vmatpush1.msra.mxu0 %v40
  %77 = vmatprep.subr.mxu0 0.0
  %78 = vmatpush1.msra.mxu0 %v41
  %79 = vmatprep.subr.mxu0 0.0
  %80 = vmatpush1.msra.mxu0 %v42
  %81 = vmatprep.subr.mxu0 0.0
  %82 = vmatpush1.msra.mxu0 %v43
  %83 = vmatprep.subr.mxu0 0.0
  %84 = vmatpush1.msra.mxu0 0.0
  %85 = vmatprep.subr.mxu0 0.0
  %86 = vmatpush1.msra.mxu0 0.0
  %87 = vmatprep.subr.mxu0 0.0
  %88 = vmatpush1.msra.mxu0 0.0
  %89 = vmatprep.subr.mxu0 0.0
  %90 = vmatpush1.msra.mxu0 0.0
  %91 = vmatprep.subr.mxu0 0.0
  %92 = vmatpush1.msra.mxu0 0.0
  %93 = vmatprep.subr.mxu0 0.0
  %94 = vmatpush1.msra.mxu0 0.0
  %95 = vmatprep.subr.mxu0 0.0
  %96 = vmatpush1.msra.mxu0 0.0
  %97 = vmatprep.subr.mxu0 0.0
  %98 = vmatpush1.msra.mxu0 0.0
  %99 = vmatprep.subr.mxu0 0.0
  %100 = vmatpush1.msra.mxu0 0.0
  %101 = vmatprep.subr.mxu0 0.0
  %102 = vmatpush1.msra.mxu0 0.0
  %103 = vmatprep.subr.mxu0 0.0
  %104 = vmatpush1.msra.mxu0 0.0
  %105 = vmatprep.subr.mxu0 0.0
  %106 = vmatpush1.msra.mxu0 0.0
  %107 = vmatprep.subr.mxu0 0.0
  %108 = vmatpush1.msra.mxu0 0.0
  %109 = vmatprep.subr.mxu0 0.0
  %110 = vmatpush1.msra.mxu0 0.0
  %111 = vmatprep.subr.mxu0 0.0
  %112 = vmatpush1.msra.mxu0 0.0
  %113 = vmatprep.subr.mxu0 0.0
  %114 = vmatpush1.msra.mxu0 0.0
  %115 = vmatprep.mubr.f32.mxu0 0.0
  %116 = vmatmul.mubr.f32.gmra.mrb[0].mxu0 %v26
  %v117 = vpop.f32.mrb[0].mxu0
  %v118 = vadd.f32 %v49, %v117
  %v119 = vpop.f32.mrb[0].mxu0
  %120 = vmatprep.mubr.f32.mxu0 0.0
  %121 = vmatmul.mubr.f32.gmra.mrb[0].mxu0 %v27
  %v122 = vpop.f32.mrb[0].mxu0
  %v123 = vadd.f32 %v49, %v122
  %v124 = vpop.f32.mrb[0].mxu0
  %125 = vdwg.mxu0
  %v126 = vmax.f32 %v118, 0.0
  %v127 = vmax.f32 %v123, 0.0
  %v128 = vld [vmem:[%s3] sm:$0xff]
  %v129 = vld [vmem:[%s3 + $0x8] sm:$0xff]
  %v130 = vld [vmem:[%s3 + $0x10] sm:$0xff]
  %v131 = vld [vmem:[%s3 + $0x18] sm:$0xff]
  %v132 = vld [vmem:[%s3 + $0x20] sm:$0xff]
  %v133 = vld [vmem:[%s3 + $0x28] sm:$0xff]
  %v134 = vld [vmem:[%s3 + $0x30] sm:$0xff]
  %v135 = vld [vmem:[%s3 + $0x38] sm:$0xff]
  %v136 = vld [vmem:[%s3 + $0x40] sm:$0xff]
  %v137 = vld [vmem:[%s3 + $0x48] sm:$0xff]
  %v138 = vld [vmem:[%s3 + $0x50] sm:$0xff]
  %v139 = vld [vmem:[%s3 + $0x58] sm:$0xff]
  %v140 = vld [vmem:[%s3 + $0x60] sm:$0xff]
  %v141 = vld [vmem:[%s3 + $0x68] sm:$0xff]
  %v142 = vld [vmem:[%s3 + $0x70] sm:$0xff]
  %v143 = vld [vmem:[%s3 + $0x78] sm:$0xff]
  %v144 = vld [vmem:[%s4] sm:$0x1]
  %v146 = vlaneseq
  %v147 = vshrl.u32 %v146, 7
  %v148 = vsub.s32 0, %v147
  %v149 = vrot.slane %v144, %v148
  %151 = vmatprep.subr.mxu0 0.0
  %152 = vmatpush1.msra.mxu0 %v128
  %153 = vmatprep.subr.mxu0 0.0
  %154 = vmatpush1.msra.mxu0 %v129
  %155 = vmatprep.subr.mxu0 0.0
  %156 = vmatpush1.msra.mxu0 %v130
  %157 = vmatprep.subr.mxu0 0.0
  %158 = vmatpush1.msra.mxu0 %v131
  %159 = vmatprep.subr.mxu0 0.0
  %160 = vmatpush1.msra.mxu0 %v132
  %161 = vmatprep.subr.mxu0 0.0
  %162 = vmatpush1.msra.mxu0 %v133
  %163 = vmatprep.subr.mxu0 0.0
  %164 = vmatpush1.msra.mxu0 %v134
  %165 = vmatprep.subr.mxu0 0.0
  %166 = vmatpush1.msra.mxu0 %v135
  %167 = vmatprep.subr.mxu0 0.0
  %168 = vmatpush1.msra.mxu0 %v136
  %169 = vmatprep.subr.mxu0 0.0
  %170 = vmatpush1.msra.mxu0 %v137
  %171 = vmatprep.subr.mxu0 0.0
  %172 = vmatpush1.msra.mxu0 %v138
  %173 = vmatprep.subr.mxu0 0.0
  %174 = vmatpush1.msra.mxu0 %v139
  %175 = vmatprep.subr.mxu0 0.0
  %176 = vmatpush1.msra.mxu0 %v140
  %177 = vmatprep.subr.mxu0 0.0
  %178 = vmatpush1.msra.mxu0 %v141
  %179 = vmatprep.subr.mxu0 0.0
  %180 = vmatpush1.msra.mxu0 %v142
  %181 = vmatprep.subr.mxu0 0.0
  %182 = vmatpush1.msra.mxu0 %v143
  %183 = vmatprep.subr.mxu0 0.0
  %184 = vmatpush1.msra.mxu0 0.0
  %185 = vmatprep.subr.mxu0 0.0
  %186 = vmatpush1.msra.mxu0 0.0
  %187 = vmatprep.subr.mxu0 0.0
  %188 = vmatpush1.msra.mxu0 0.0
  %189 = vmatprep.subr.mxu0 0.0
  %190 = vmatpush1.msra.mxu0 0.0
  %191 = vmatprep.subr.mxu0 0.0
  %192 = vmatpush1.msra.mxu0 0.0
  %193 = vmatprep.subr.mxu0 0.0
  %194 = vmatpush1.msra.mxu0 0.0
  %195 = vmatprep.subr.mxu0 0.0
  %196 = vmatpush1.msra.mxu0 0.0
  %197 = vmatprep.subr.mxu0 0.0
  %198 = vmatpush1.msra.mxu0 0.0
  %199 = vmatprep.subr.mxu0 0.0
  %200 = vmatpush1.msra.mxu0 0.0
  %201 = vmatprep.subr.mxu0 0.0
  %202 = vmatpush1.msra.mxu0 0.0
  %203 = vmatprep.subr.mxu0 0.0
  %204 = vmatpush1.msra.mxu0 0.0
  %205 = vmatprep.subr.mxu0 0.0
  %206 = vmatpush1.msra.mxu0 0.0
  %207 = vmatprep.subr.mxu0 0.0
  %208 = vmatpush1.msra.mxu0 0.0
  %209 = vmatprep.subr.mxu0 0.0
  %210 = vmatpush1.msra.mxu0 0.0
  %211 = vmatprep.subr.mxu0 0.0
  %212 = vmatpush1.msra.mxu0 0.0
  %213 = vmatprep.subr.mxu0 0.0
  %214 = vmatpush1.msra.mxu0 0.0
  %215 = vmatprep.mubr.f32.mxu0 0.0
  %216 = vmatmul.mubr.f32.gmra.mrb[0].mxu0 %v126
  %v217 = vpop.f32.mrb[0].mxu0
  %v218 = vadd.f32 %v149, %v217
  %v219 = vpop.f32.mrb[0].mxu0
  %220 = vmatprep.mubr.f32.mxu0 0.0
  %221 = vmatmul.mubr.f32.gmra.mrb[0].mxu0 %v127
  %v222 = vpop.f32.mrb[0].mxu0
  %v223 = vadd.f32 %v149, %v222
  %v224 = vpop.f32.mrb[0].mxu0
  %225 = vdwg.mxu0
  %v226 = vmax.f32 %v218, 0.0
  %v227 = vmax.f32 %v223, 0.0
  %v228 = vld [vmem:[%s5] sm:$0xff]
  %v229 = vld [vmem:[%s5 + $0x8] sm:$0xff]
  %v230 = vld [vmem:[%s5 + $0x10] sm:$0xff]
  %v231 = vld [vmem:[%s5 + $0x18] sm:$0xff]
  %v232 = vld [vmem:[%s5 + $0x20] sm:$0xff]
  %v233 = vld [vmem:[%s5 + $0x28] sm:$0xff]
  %v234 = vld [vmem:[%s5 + $0x30] sm:$0xff]
  %v235 = vld [vmem:[%s5 + $0x38] sm:$0xff]
  %v236 = vld [vmem:[%s5 + $0x40] sm:$0xff]
  %v237 = vld [vmem:[%s5 + $0x48] sm:$0xff]
  %v238 = vld [vmem:[%s5 + $0x50] sm:$0xff]
  %v239 = vld [vmem:[%s5 + $0x58] sm:$0xff]
  %v240 = vld [vmem:[%s5 + $0x60] sm:$0xff]
  %v241 = vld [vmem:[%s5 + $0x68] sm:$0xff]
  %v242 = vld [vmem:[%s5 + $0x70] sm:$0xff]
  %v243 = vld [vmem:[%s5 + $0x78] sm:$0xff]
  %v244 = vld [vmem:[%s6] sm:$0x1]
  %v246 = vlaneseq
  %v247 = vshrl.u32 %v246, 7
  %v248 = vsub.s32 0, %v247
  %v249 = vrot.slane %v244, %v248
  %251 = vmatprep.subr.mxu0 0.0
  %252 = vmatpush1.msra.mxu0 %v228
  %253 = vmatprep.subr.mxu0 0.0
  %254 = vmatpush1.msra.mxu0 %v229
  %255 = vmatprep.subr.mxu0 0.0
  %256 = vmatpush1.msra.mxu0 %v230
  %257 = vmatprep.subr.mxu0 0.0
  %258 = vmatpush1.msra.mxu0 %v231
  %259 = vmatprep.subr.mxu0 0.0
  %260 = vmatpush1.msra.mxu0 %v232
  %261 = vmatprep.subr.mxu0 0.0
  %262 = vmatpush1.msra.mxu0 %v233
  %263 = vmatprep.subr.mxu0 0.0
  %264 = vmatpush1.msra.mxu0 %v234
  %265 = vmatprep.subr.mxu0 0.0
  %266 = vmatpush1.msra.mxu0 %v235
  %267 = vmatprep.subr.mxu0 0.0
  %268 = vmatpush1.msra.mxu0 %v236
  %269 = vmatprep.subr.mxu0 0.0
  %270 = vmatpush1.msra.mxu0 %v237
  %271 = vmatprep.subr.mxu0 0.0
  %272 = vmatpush1.msra.mxu0 %v238
  %273 = vmatprep.subr.mxu0 0.0
  %274 = vmatpush1.msra.mxu0 %v239
  %275 = vmatprep.subr.mxu0 0.0
  %276 = vmatpush1.msra.mxu0 %v240
  %277 = vmatprep.subr.mxu0 0.0
  %278 = vmatpush1.msra.mxu0 %v241
  %279 = vmatprep.subr.mxu0 0.0
  %280 = vmatpush1.msra.mxu0 %v242
  %281 = vmatprep.subr.mxu0 0.0
  %282 = vmatpush1.msra.mxu0 %v243
  %283 = vmatprep.subr.mxu0 0.0
  %284 = vmatpush1.msra.mxu0 0.0
  %285 = vmatprep.subr.mxu0 0.0
  %286 = vmatpush1.msra.mxu0 0.0
  %287 = vmatprep.subr.mxu0 0.0
  %288 = vmatpush1.msra.mxu0 0.0
  %289 = vmatprep.subr.mxu0 0.0
  %290 = vmatpush1.msra.mxu0 0.0
  %291 = vmatprep.subr.mxu0 0.0
  %292 = vmatpush1.msra.mxu0 0.0
  %293 = vmatprep.subr.mxu0 0.0
  %294 = vmatpush1.msra.mxu0 0.0
  %295 = vmatprep.subr.mxu0 0.0
  %296 = vmatpush1.msra.mxu0 0.0
  %297 = vmatprep.subr.mxu0 0.0
  %298 = vmatpush1.msra.mxu0 0.0
  %299 = vmatprep.subr.mxu0 0.0
  %300 = vmatpush1.msra.mxu0 0.0
  %301 = vmatprep.subr.mxu0 0.0
  %302 = vmatpush1.msra.mxu0 0.0
  %303 = vmatprep.subr.mxu0 0.0
  %304 = vmatpush1.msra.mxu0 0.0
  %305 = vmatprep.subr.mxu0 0.0
  %306 = vmatpush1.msra.mxu0 0.0
  %307 = vmatprep.subr.mxu0 0.0
  %308 = vmatpush1.msra.mxu0 0.0
  %309 = vmatprep.subr.mxu0 0.0
  %310 = vmatpush1.msra.mxu0 0.0
  %311 = vmatprep.subr.mxu0 0.0
  %312 = vmatpush1.msra.mxu0 0.0
  %313 = vmatprep.subr.mxu0 0.0
  %314 = vmatpush1.msra.mxu0 0.0
  %315 = vmatprep.mubr.f32.mxu0 0.0
  %316 = vmatmul.mubr.f32.gmra.mrb[0].mxu0 %v226
  %v317 = vpop.f32.mrb[0].mxu0
  %v318 = vadd.f32 %v249, %v317
  %v319 = vpop.f32.mrb[0].mxu0
  %320 = vmatprep.mubr.f32.mxu0 0.0
  %321 = vmatmul.mubr.f32.gmra.mrb[0].mxu0 %v227
  %v322 = vpop.f32.mrb[0].mxu0
  %v323 = vadd.f32 %v249, %v322
  %v324 = vpop.f32.mrb[0].mxu0
  %325 = vdwg.mxu0
  %326 = vst [vmem:[%s7] sm:$0xff] %v318
  %327 = vst [vmem:[%s7 + $0x8] sm:$0xff] %v323
  // Predicated region
  $region30: #{mlp_forward.1} parent=0 // pred_check
    _
  $region31: #{mlp_forward.1} parent=0 // pred_check_branch
    %329 = sbr.rel (0) target = $region33
  $region32: #{mlp_forward.1} parent=0 // pred_region
    _
  $region33: #{mlp_forward.1} parent=0 // pred_fallthru
    _
  // Predicated region
  $region34: #{mlp_forward.1} parent=0 // pred_check
    _
  $region35: #{mlp_forward.1} parent=0 // pred_check_branch
    %331 = sbr.rel (0) target = $region37
  $region36: #{mlp_forward.1} parent=0 // pred_region
    _
  $region37: #{mlp_forward.1} parent=0 // pred_fallthru
    _

</llo_original>
